<compile_context>
chip_gen: v6e
topology: v6e:2x2x1
jax: 0.10.0
libtpu: 0.0.40
codegen_flags: <defaults>
</compile_context>

<pallas_src>
import jax
import jax.numpy as jnp
from jax.experimental import pallas as pl
from jax.experimental.pallas import tpu as pltpu

EPS = 1e-06
LANES = 128


def _charbonnier_kernel(x_ref, y_ref, o_ref):
    # o_ref is an (8, 128) f32 block that stays resident across the inner
    # ("arbitrary") grid axis: zero it on the first step of the reduction.
    @pl.when(pl.program_id(1) == 0)
    def _():
        o_ref[...] = jnp.zeros_like(o_ref)

    x = x_ref[...].astype(jnp.float32)
    y = y_ref[...].astype(jnp.float32)
    diff = x - y
    err = jnp.sqrt(diff * diff + EPS)                   # (tile_rows, 128)

    # Partial reduce over the leading "sublane block" axis only: this is a
    # layout-preserving regroup into (tile_rows//8, 8, 128) vreg blocks and a
    # pure-VPU elementwise add — no XLU cross-lane work on the hot path.
    o_ref[...] += err.reshape(-1, 8, LANES).sum(axis=0)


def l1_charbonnier_loss(x, y, *, tile_rows=1024, num_cores=2):
    """Matches torch: sum(sqrt((X - Y)^2 + 1e-6)) over all elements."""
    assert x.shape == y.shape, "X and Y must have identical shapes"
    x = jnp.asarray(x)
    y = jnp.asarray(y)
    xf = jnp.ravel(x)
    yf = jnp.ravel(y)
    n = xf.shape[0]

    # Sanitize / size the tile: multiple of 8 rows, no bigger than the
    # per-core problem so tiny inputs don't get massively over-padded.
    tile_rows = max(8, (tile_rows // 8) * 8)
    rows_needed = -(-n // LANES)
    rows_per_core_needed = max(1, -(-rows_needed // num_cores))
    eff_rows = max(8, min(tile_rows, ((rows_per_core_needed + 7) // 8) * 8))

    per_core_chunk = eff_rows * LANES
    tiles_per_core = max(1, -(-n // (num_cores * per_core_chunk)))
    n_pad = num_cores * tiles_per_core * per_core_chunk
    pad = n_pad - n

    # Zero-pad (no mask stream): each padded element adds exactly sqrt(EPS),
    # removed after the kernel.
    xf = jnp.pad(xf, (0, pad))
    yf = jnp.pad(yf, (0, pad))
    rows = n_pad // LANES
    x2 = xf.reshape(rows, LANES)
    y2 = yf.reshape(rows, LANES)

    in_spec = pl.BlockSpec(
        (eff_rows, LANES), lambda c, i: (c * tiles_per_core + i, 0)
    )
    # One resident (8, 128) accumulator block per core.
    out_spec = pl.BlockSpec((8, LANES), lambda c, i: (c, 0))

    partial = pl.pallas_call(
        _charbonnier_kernel,
        out_shape=jax.ShapeDtypeStruct((num_cores * 8, LANES), jnp.float32),
        grid_spec=pltpu.PrefetchScalarGridSpec(
            num_scalar_prefetch=0,
            grid=(num_cores, tiles_per_core),
            in_specs=[in_spec, in_spec],
            out_specs=out_spec,
        ),
        compiler_params=pltpu.CompilerParams(
            dimension_semantics=("parallel", "arbitrary"),
        ),
    )(x2, y2)

    # Final tiny reduce in XLA + padding correction (sqrt(EPS) per pad elem).
    correction = jnp.float32(pad) * jnp.sqrt(jnp.float32(EPS))
    return jnp.sum(partial) - correction


if __name__ == "__main__":
    key = jax.random.PRNGKey(0)
    kx, ky = jax.random.split(key)
    # Small NCHW-shaped inputs consistent with an image-restoration loss.
    X = jax.random.normal(kx, (2, 4, 16, 16), dtype=jnp.float32)
    Y = jax.random.normal(ky, (2, 4, 16, 16), dtype=jnp.float32)

    loss = jax.block_until_ready(l1_charbonnier_loss(X, Y))

    # Reference check in plain JAX.
    ref = jnp.sum(jnp.sqrt((X - Y) * (X - Y) + EPS))
    assert jnp.allclose(loss, ref, rtol=1e-4, atol=1e-3), (loss, ref)

    print("KERNEL_OK")
</pallas_src>

<mosaic_0001>
module attributes {stable_mosaic.version = 11 : i64} {
  func.func @_charbonnier_kernel(%arg0: i32, %arg1: i32, %arg2: memref<8x128xf32, #tpu.memory_space<vmem>>, %arg3: memref<8x128xf32, #tpu.memory_space<vmem>>, %arg4: memref<8x128xf32, #tpu.memory_space<vmem>>) attributes {dimension_semantics = [#tpu.dimension_semantics<parallel>, #tpu.dimension_semantics<arbitrary>], iteration_bounds = array<i64: 2, 1>, scalar_prefetch = 0 : i64, scratch_operands = 0 : i64, tpu.core_type = #tpu.core_type<tc>, window_params = [{transform_indices = @transform_0, window_bounds = array<i64: 8, 128>}, {transform_indices = @transform_1, window_bounds = array<i64: 8, 128>}, {transform_indices = @transform_2, window_bounds = array<i64: 8, 128>}]} {
    %c0_i32 = arith.constant 0 : i32
    %0 = arith.cmpi eq, %arg1, %c0_i32 : i32
    %1 = arith.extui %0 : i1 to i32
    %c0_i32_0 = arith.constant 0 : i32
    %2 = arith.cmpi ne, %1, %c0_i32_0 : i32
    scf.if %2 {
      %cst_9 = arith.constant 0.000000e+00 : f32
      %15 = vector.broadcast %cst_9 : f32 to vector<8x128xf32>
      %c0_10 = arith.constant 0 : index
      %c0_11 = arith.constant 0 : index
      %16 = vector.load %arg4[%c0_10, %c0_11] : memref<8x128xf32, #tpu.memory_space<vmem>>, vector<8x128xf32>
      tpu.vector_store %arg4[%c0_10, %c0_11], %15 {strides = array<i32>} : memref<8x128xf32, #tpu.memory_space<vmem>>, vector<8x128xf32>,
    } else {
    }
    %c0 = arith.constant 0 : index
    %c0_1 = arith.constant 0 : index
    %3 = vector.load %arg2[%c0, %c0_1] : memref<8x128xf32, #tpu.memory_space<vmem>>, vector<8x128xf32>
    %c0_2 = arith.constant 0 : index
    %c0_3 = arith.constant 0 : index
    %4 = vector.load %arg3[%c0_2, %c0_3] : memref<8x128xf32, #tpu.memory_space<vmem>>, vector<8x128xf32>
    %5 = arith.subf %3, %4 : vector<8x128xf32>
    %6 = arith.mulf %5, %5 : vector<8x128xf32>
    %cst = arith.constant 9.99999997E-7 : f32
    %7 = vector.broadcast %cst : f32 to vector<8x128xf32>
    %8 = arith.addf %6, %7 : vector<8x128xf32>
    %9 = math.sqrt %8 : vector<8x128xf32>
    %c0_4 = arith.constant 0 : index
    %c0_5 = arith.constant 0 : index
    %10 = vector.load %arg4[%c0_4, %c0_5] : memref<8x128xf32, #tpu.memory_space<vmem>>, vector<8x128xf32>
    %11 = vector.shape_cast %9 : vector<8x128xf32> to vector<1x8x128xf32>
    %cst_6 = arith.constant dense<0.000000e+00> : vector<8x128xf32>
    %12 = vector.multi_reduction <add>, %11, %cst_6 [0] : vector<1x8x128xf32> to vector<8x128xf32>
    %13 = arith.addf %10, %12 : vector<8x128xf32>
    %c0_7 = arith.constant 0 : index
    %c0_8 = arith.constant 0 : index
    %14 = vector.load %arg4[%c0_7, %c0_8] : memref<8x128xf32, #tpu.memory_space<vmem>>, vector<8x128xf32>
    tpu.vector_store %arg4[%c0_7, %c0_8], %13 {strides = array<i32>} : memref<8x128xf32, #tpu.memory_space<vmem>>, vector<8x128xf32>,
    return
  }
  func.func @transform_0(%arg0: i32, %arg1: i32) -> (i32, i32) {
    %c1_i32 = arith.constant 1 : i32
    %0 = arith.muli %arg0, %c1_i32 : i32
    %1 = arith.addi %0, %arg1 : i32
    %c0_i32 = arith.constant 0 : i32
    %c0_i32_0 = arith.constant 0 : i32
    return %1, %c0_i32 : i32, i32
  }
  func.func @transform_1(%arg0: i32, %arg1: i32) -> (i32, i32) {
    %c1_i32 = arith.constant 1 : i32
    %0 = arith.muli %arg0, %c1_i32 : i32
    %1 = arith.addi %0, %arg1 : i32
    %c0_i32 = arith.constant 0 : i32
    %c0_i32_0 = arith.constant 0 : i32
    return %1, %c0_i32 : i32, i32
  }
  func.func @transform_2(%arg0: i32, %arg1: i32) -> (i32, i32) {
    %c0_i32 = arith.constant 0 : i32
    %c0_i32_0 = arith.constant 0 : i32
    return %arg0, %c0_i32 : i32, i32
  }
}

</mosaic_0001>

<llo_original>
// kernel: tpu_custom_call.1
$region0: #{tpu_custom_call.1}
  #allocation0 [shape = 'u32[]', space=smem, size = 0x4, offset = 0x4, fixed_abs, tag = 'smem constant byte address 0x4 - core index']
  #allocation1 [shape = 'u32[144,128]{1,0:T(1,128)}', space=vmem, size = 0x12000, scoped, tag = 'internal scratch']
  %s0 = inlined_call_operand.hbm [shape: f32[16,128], index: 0, kind: input, shape index: {}]
  %s1 = inlined_call_operand.hbm [shape: f32[16,128], index: 1, kind: input, shape index: {}]
  %s2 = inlined_call_operand.hbm [shape: f32[16,128], index: 2, kind: output, shape index: {}]
  %s3 = sld [smem:[#allocation0]]
  $region53: #{tpu_custom_call.1} parent=0
    _
  %s5 = ssub.s32 1, %s3
  %s6 = scalar_select 0, %s5, %s3
  $region1: #{tpu_custom_call.1} parent=0
    #allocation2 [shape = 'u8[8192]{0}', space=vmem, size = 0x2000, scoped, tag = 'input window, operand 0']
    #allocation3 [shape = 's32[2]{0}', space=sflag, size = 0x8, scoped, tag = 'scoped memory for tpu_custom_call.1']
    #allocation4 [shape = 's32[2]{0}', space=sflag, size = 0x8, scoped, tag = 'scoped memory for tpu_custom_call.1']
    #allocation5 [shape = 'u8[8192]{0}', space=vmem, size = 0x2000, scoped, tag = 'input window, operand 1']
    #allocation6 [shape = 's32[2]{0}', space=sflag, size = 0x8, scoped, tag = 'scoped memory for tpu_custom_call.1']
    #allocation7 [shape = 'u8[8192]{0}', space=vmem, size = 0x2000, scoped, tag = 'output window, operand 0']
    %7 = vsyncpa [#allocation3], 0
    %s8 = scalar_lea.sflag [#allocation3], 1
    %9 = vsyncpa %s8, 0
    %10 = vsyncpa [#allocation6], 0
    %s11 = scalar_lea.sflag [#allocation6], 1
    %12 = vsyncpa %s11, 0
    %13 = vsyncpa [#allocation4], 0
    %s14 = scalar_lea.sflag [#allocation4], 1
    %15 = vsyncpa %s14, 0
    loop: start=0, step=1, limit=4
    $region2: #{tpu_custom_call.1} parent=1 // loop_pre_header
      _
    $region3: #{tpu_custom_call.1} parent=1 // loop_header
      %s17 = sphi 0, %s21
      %p18 = scmp.ge.s32.totalorder %s17, 4
      %s24 = sphi 0, %s36
      %s25 = sphi 0, %s32
      %s26 = sphi 0, %s24
      %s27 = sphi 0, %s25
      %s28 = sphi 0, %s26
      %s29 = sphi 0, %s27
      %s41 = sphi 0, %s43
      %s44 = sphi 0, %s41
      %s45 = sphi 0, %s44
      %s61 = sphi 0, %s45
      %s69 = sphi 0, %s71
      %s72 = sphi 0, %s69
      %s73 = sphi 0, %s72
      %s89 = sphi 0, %s73
      %s95 = sphi 0, %s97
      %s98 = sphi 0, %s95
      %s99 = sphi 0, %s98
      %s115 = sphi 0, %s99
    $region4: #{tpu_custom_call.1} parent=1 // loop_header_branch
      %20 = sbr.rel (%p18) target = $region8
    $region5: #{tpu_custom_call.1} parent=1 // loop_body
      %s22 = ssub.s32 %s17, 1
      %s23 = ssub.s32 %s17, 2
      %s30 = sadd.s32 1, %s25
      %p31 = scmp.ge.s32.totalorder %s30, 1
      %s32 = scalar_select %p31, 0, %s30
      %s33 = sadd.s32 1, %s24
      %s34 = scalar_select %p31, %s33, %s24
      %p35 = scmp.ge.s32.totalorder %s34, 2
      %s36 = scalar_select %p35, 0, %s34
      %s37 = sadd.s32 %s24, %s25
      %s38 = sadd.s32 %s36, %s32
      %s39 = ssub.s32 %s37, %s38
      %p40 = scmp.eq.s32.totalorder %s39, 0
      %s42 = sadd.s32 %s41, 1
      %s43 = scalar_select %p40, %s41, %s42
      %p46 = pneg %p40
      %p47 = scmp.eq.s32.totalorder %s17, 1
      %p48 = por %p46, %p47
      %p49 = scmp.ne.s32.totalorder %s41, %s44
      %p50 = scmp.eq.s32.totalorder %s17, 0
      %p51 = por %p49, %p50
      %p52 = scmp.ne.s32.totalorder %s41, %s44
      %p53 = scmp.eq.s32.totalorder %s22, 1
      %p54 = por %p52, %p53
      %p55 = scmp.ne.s32.totalorder %s44, %s45
      %p56 = scmp.eq.s32.totalorder %s22, 0
      %p57 = por %p55, %p56
      %p58 = scmp.ne.s32.totalorder %s44, %s45
      %p59 = scmp.eq.s32.totalorder %s23, 1
      %p60 = por %p58, %p59
      %p62 = scmp.ne.s32.totalorder %s45, %s61
      %p63 = scmp.eq.s32.totalorder %s23, 0
      %p64 = por %p62, %p63
      %s65 = sadd.s32 %s24, %s25
      %s66 = sadd.s32 %s36, %s32
      %s67 = ssub.s32 %s65, %s66
      %p68 = scmp.eq.s32.totalorder %s67, 0
      %s70 = sadd.s32 %s69, 1
      %s71 = scalar_select %p68, %s69, %s70
      %p74 = pneg %p68
      %p75 = scmp.eq.s32.totalorder %s17, 1
      %p76 = por %p74, %p75
      %p77 = scmp.ne.s32.totalorder %s69, %s72
      %p78 = scmp.eq.s32.totalorder %s17, 0
      %p79 = por %p77, %p78
      %p80 = scmp.ne.s32.totalorder %s69, %s72
      %p81 = scmp.eq.s32.totalorder %s22, 1
      %p82 = por %p80, %p81
      %p83 = scmp.ne.s32.totalorder %s72, %s73
      %p84 = scmp.eq.s32.totalorder %s22, 0
      %p85 = por %p83, %p84
      %p86 = scmp.ne.s32.totalorder %s72, %s73
      %p87 = scmp.eq.s32.totalorder %s23, 1
      %p88 = por %p86, %p87
      %p90 = scmp.ne.s32.totalorder %s73, %s89
      %p91 = scmp.eq.s32.totalorder %s23, 0
      %p92 = por %p90, %p91
      %s93 = ssub.s32 %s24, %s36
      %p94 = scmp.eq.s32.totalorder %s93, 0
      %s96 = sadd.s32 %s95, 1
      %s97 = scalar_select %p94, %s95, %s96
      %p100 = pneg %p94
      %p101 = scmp.eq.s32.totalorder %s17, 1
      %p102 = por %p100, %p101
      %p103 = scmp.ne.s32.totalorder %s95, %s98
      %p104 = scmp.eq.s32.totalorder %s17, 0
      %p105 = por %p103, %p104
      %p106 = scmp.ne.s32.totalorder %s95, %s98
      %p107 = scmp.eq.s32.totalorder %s22, 1
      %p108 = por %p106, %p107
      %p109 = scmp.ne.s32.totalorder %s98, %s99
      %p110 = scmp.eq.s32.totalorder %s22, 0
      %p111 = por %p109, %p110
      %p112 = scmp.ne.s32.totalorder %s98, %s99
      %p113 = scmp.eq.s32.totalorder %s23, 1
      %p114 = por %p112, %p113
      %p116 = scmp.ne.s32.totalorder %s99, %s115
      %p117 = scmp.eq.s32.totalorder %s23, 0
      %p118 = por %p116, %p117
      %p119 = scmp.le.s32.totalorder 1, %s17
      %p120 = scmp.lt.s32.totalorder %s17, 3
      %p121 = pnand %p119, %p120
      %p122 = pneg %p121
      // Predicated region
      $region9: #{tpu_custom_call.1} parent=5 // pred_check
        _
      $region10: #{tpu_custom_call.1} parent=5 // pred_check_branch
        %124 = sbr.rel (%p121) target = $region12
      $region11: #{tpu_custom_call.1} parent=5 // pred_region
        %s125 = ssub.s32 %s17, 1
      $region12: #{tpu_custom_call.1} parent=5 // pred_fallthru
        _
      %p126 = scmp.lt.s32.totalorder %s17, 2
      // Predicated region
      $region13: #{tpu_custom_call.1} parent=5 // pred_check
        %p127 = pneg %p126
      $region14: #{tpu_custom_call.1} parent=5 // pred_check_branch
        %129 = sbr.rel (%p127) target = $region16
      $region15: #{tpu_custom_call.1} parent=5 // pred_region
        // Predicated region
        $region17: #{tpu_custom_call.1} parent=15 // pred_check
          %p130 = pneg %p51
        $region18: #{tpu_custom_call.1} parent=15 // pred_check_branch
          %132 = sbr.rel (%p130) target = $region20
        $region19: #{tpu_custom_call.1} parent=15 // pred_region
          %s133 = sand.u32 %s41, 1
          %s134 = scalar_lea.sflag [#allocation3], %s133
          %s135 = sand.u32 %s41, 1
          %s136 = smul.addr %s135, 8
          %s137 = scalar_lea.vmem [#allocation2], %s136
          %s138 = sadd.s32 %s24, %s25
          %s140 = ssub.s32 128, 128
          %141 = vsyncadd %s134, %s140
          %s142 = smul.addr %s138, 128
          %s143 = scalar_lea.hbm %s0, %s142
          %s145 = sshll.u32 %s137, 4
          %s146 = int_to_ptr.vmem [resolvable:$true] %s145
          %148 = dma.hbm_to_vmem [thread:$0]  %s143, 128, %s146, %s134
        $region20: #{tpu_custom_call.1} parent=15 // pred_fallthru
          _
        // Predicated region
        $region21: #{tpu_custom_call.1} parent=15 // pred_check
          %p149 = pneg %p79
        $region22: #{tpu_custom_call.1} parent=15 // pred_check_branch
          %151 = sbr.rel (%p149) target = $region24
        $region23: #{tpu_custom_call.1} parent=15 // pred_region
          %s152 = sand.u32 %s69, 1
          %s153 = scalar_lea.sflag [#allocation6], %s152
          %s154 = sand.u32 %s69, 1
          %s155 = smul.addr %s154, 8
          %s156 = scalar_lea.vmem [#allocation5], %s155
          %s157 = sadd.s32 %s24, %s25
          %s159 = ssub.s32 128, 128
          %160 = vsyncadd %s153, %s159
          %s161 = smul.addr %s157, 128
          %s162 = scalar_lea.hbm %s1, %s161
          %s164 = sshll.u32 %s156, 4
          %s165 = int_to_ptr.vmem [resolvable:$true] %s164
          %167 = dma.hbm_to_vmem [thread:$0]  %s162, 128, %s165, %s153
        $region24: #{tpu_custom_call.1} parent=15 // pred_fallthru
          _
      $region16: #{tpu_custom_call.1} parent=5 // pred_fallthru
        _
      %p168 = scmp.le.s32.totalorder 1, %s17
      %p169 = scmp.lt.s32.totalorder %s17, 3
      %p170 = pnand %p168, %p169
      %p171 = pneg %p170
      // Predicated region
      $region25: #{tpu_custom_call.1} parent=5 // pred_check
        _
      $region26: #{tpu_custom_call.1} parent=5 // pred_check_branch
        %173 = sbr.rel (%p170) target = $region28
      $region27: #{tpu_custom_call.1} parent=5 // pred_region
        %s174 = ssub.s32 %s17, 1
        %s175 = sand.u32 %s44, 1
        %s176 = scalar_lea.sflag [#allocation3], %s175
        %s177 = sand.u32 %s44, 1
        %s178 = smul.addr %s177, 8
        %s179 = scalar_lea.vmem [#allocation2], %s178
        // Predicated region
        $region29: #{tpu_custom_call.1} parent=27 // pred_check
          %p180 = pneg %p57
        $region30: #{tpu_custom_call.1} parent=27 // pred_check_branch
          %182 = sbr.rel (%p180) target = $region32
        $region31: #{tpu_custom_call.1} parent=27 // pred_region
          %183 = dma.done %s176, 128
        $region32: #{tpu_custom_call.1} parent=27 // pred_fallthru
          _
        %s184 = sand.u32 %s72, 1
        %s185 = scalar_lea.sflag [#allocation6], %s184
        %s186 = sand.u32 %s72, 1
        %s187 = smul.addr %s186, 8
        %s188 = scalar_lea.vmem [#allocation5], %s187
        // Predicated region
        $region33: #{tpu_custom_call.1} parent=27 // pred_check
          %p189 = pneg %p85
        $region34: #{tpu_custom_call.1} parent=27 // pred_check_branch
          %191 = sbr.rel (%p189) target = $region36
        $region35: #{tpu_custom_call.1} parent=27 // pred_region
          %192 = dma.done %s185, 128
        $region36: #{tpu_custom_call.1} parent=27 // pred_fallthru
          _
        %s193 = sand.u32 %s44, 1
        %s194 = scalar_lea.sflag [#allocation3], %s193
        %s195 = sand.u32 %s44, 1
        %s196 = smul.addr %s195, 8
        %s197 = scalar_lea.vmem [#allocation2], %s196
        %p198 = pneg %p57
        %p199 = pneg %p54
        %s200 = sand.u32 %s72, 1
        %s201 = scalar_lea.sflag [#allocation6], %s200
        %s202 = sand.u32 %s72, 1
        %s203 = smul.addr %s202, 8
        %s204 = scalar_lea.vmem [#allocation5], %s203
        %p205 = pneg %p85
        %p206 = pneg %p82
        %p207 = pneg %p111
        %p208 = pneg %p108
        %s209 = sand.u32 %s98, 1
        %s210 = scalar_lea.sflag [#allocation4], %s209
        %s211 = sand.u32 %s98, 1
        %s212 = smul.addr %s211, 8
        %s213 = scalar_lea.vmem [#allocation7], %s212
        %s214 = sadd.s32 %s26, %s27
        %s215 = sadd.s32 %s26, %s27
        %p216 = scmp.eq.s32.totalorder %s27, 0
        // Predicated region
        $region37: #{tpu_custom_call.1} parent=27 // pred_check
          %p217 = pneg %p216
        $region38: #{tpu_custom_call.1} parent=27 // pred_check_branch
          %219 = sbr.rel (%p217) target = $region40
        $region39: #{tpu_custom_call.1} parent=27 // pred_region
          %220 = vst [vmem:[%s213] sm:$0xff] 0.0
        $region40: #{tpu_custom_call.1} parent=27 // pred_fallthru
          _
        %v221 = vld [vmem:[%s179] sm:$0xff]
        %v222 = vld [vmem:[%s188] sm:$0xff]
        %v223 = vsub.f32 %v221, %v222
        %v224 = vmul.f32 %v223, %v223
        %v225 = vadd.f32 %v224, 1e-06
        %v226 = vrsqrt.pop %v225
        %v227 = vmul.f32 %v225, %v226
        %vm228 = vcmp.eq.f32.partialorder %v225, inf
        %v229 = vsel %vm228, %v225, %v227
        %vm230 = vcmp.eq.f32.partialorder %v225, 0.0
        %v231 = vand.u32 %v225, 2147483648
        %v232 = vsel %vm230, %v231, %v229
        %v233 = vld [vmem:[%s213] sm:$0xff]
        %v234 = vadd.f32 %v232, 0.0
        %v235 = vadd.f32 %v233, %v234
        %236 = vst [vmem:[%s213] sm:$0xff] %v235
        %s237 = sand.u32 %s98, 1
        %s238 = scalar_lea.sflag [#allocation4], %s237
        %s239 = sand.u32 %s98, 1
        %s240 = smul.addr %s239, 8
        %s241 = scalar_lea.vmem [#allocation7], %s240
        // Predicated region
        $region41: #{tpu_custom_call.1} parent=27 // pred_check
          %p242 = pneg %p108
        $region42: #{tpu_custom_call.1} parent=27 // pred_check_branch
          %244 = sbr.rel (%p242) target = $region44
        $region43: #{tpu_custom_call.1} parent=27 // pred_region
          %s246 = ssub.s32 128, 128
          %247 = vsyncadd %s238, %s246
          %s248 = smul.addr %s26, 128
          %s249 = scalar_lea.hbm %s2, %s248
          %s251 = sshll.u32 %s241, 4
          %s252 = int_to_ptr.vmem [resolvable:$true] %s251
          %254 = dma.vmem_to_hbm [thread:$0]  %s252, 128, %s249, %s238
        $region44: #{tpu_custom_call.1} parent=27 // pred_fallthru
          _
      $region28: #{tpu_custom_call.1} parent=5 // pred_fallthru
        _
      %p255 = scmp.le.s32.totalorder 2, %s17
      // Predicated region
      $region45: #{tpu_custom_call.1} parent=5 // pred_check
        %p256 = pneg %p255
      $region46: #{tpu_custom_call.1} parent=5 // pred_check_branch
        %258 = sbr.rel (%p256) target = $region48
      $region47: #{tpu_custom_call.1} parent=5 // pred_region
        %s259 = ssub.s32 %s17, 2
        // Predicated region
        $region49: #{tpu_custom_call.1} parent=47 // pred_check
          %p260 = pneg %p114
        $region50: #{tpu_custom_call.1} parent=47 // pred_check_branch
          %262 = sbr.rel (%p260) target = $region52
        $region51: #{tpu_custom_call.1} parent=47 // pred_region
          %s263 = sand.u32 %s99, 1
          %s264 = scalar_lea.sflag [#allocation4], %s263
          %s265 = sand.u32 %s99, 1
          %s266 = smul.addr %s265, 8
          %s267 = scalar_lea.vmem [#allocation7], %s266
          %268 = dma.done %s264, 128
        $region52: #{tpu_custom_call.1} parent=47 // pred_fallthru
          _
      $region48: #{tpu_custom_call.1} parent=5 // pred_fallthru
        _
    $region6: #{tpu_custom_call.1} parent=1 // loop_footer
      %s21 = sadd.s32 1, %s17
    $region7: #{tpu_custom_call.1} parent=1 // loop_footer_branch
      %16 = sbr.rel target = $region3
    $region8: #{tpu_custom_call.1} parent=1 // loop_exit
      _
    %269 = vsyncpa [#allocation3], 1
    %s270 = scalar_lea.sflag [#allocation3], 1
    %271 = vsyncpa %s270, 1
    %272 = vsyncpa [#allocation6], 1
    %s273 = scalar_lea.sflag [#allocation6], 1
    %274 = vsyncpa %s273, 1
    %275 = vsyncpa [#allocation4], 1
    %s276 = scalar_lea.sflag [#allocation4], 1
    %277 = vsyncpa %s276, 1

</llo_original>
